<compile_context>
chip_gen: v5e
topology: v5e:2x2
jax: 0.10.0
libtpu: 0.0.40
codegen_flags: <defaults>
</compile_context>

<pallas_src>
import jax
import jax.numpy as jnp
from jax.experimental import pallas as pl
from jax.experimental.pallas import tpu as pltpu

INPUT_DIM = 3
K_PAD = 8           # layer-1 contraction zero-padded to one sublane tile for the MXU
HIDDEN_DIM = 256
OUT_DIM = 4


def fine_mlp_kernel(x8_ref, w1p_ref, b1_ref, w2_ref, b2_ref, o_ref):
    # x8_ref : [K_PAD, TILE_N]        feature-major point tile (rows 3..7 are zero)
    # w1p_ref: [HIDDEN_DIM, K_PAD]    w1^T zero-padded, VMEM-resident across steps
    # b1_ref : [HIDDEN_DIM, 1]
    # w2_ref : [OUT_DIM, HIDDEN_DIM]  bf16, VMEM-resident
    # b2_ref : [OUT_DIM, 1]
    # o_ref  : [OUT_DIM, TILE_N]
    #
    # Layer 1 on the MXU: [256, 8] @ [8, TILE_N], f32 accumulate. Padded feature
    # rows/cols are zero so they contribute nothing.
    h = jnp.dot(w1p_ref[...], x8_ref[...], preferred_element_type=jnp.float32)
    # Only bias-add + ReLU remain on the VPU (2 ops per h vreg instead of 7).
    h = jnp.maximum(h + b1_ref[...], 0.0)

    # Layer 2 on the MXU: single-pass bf16 inputs (w2 passed pre-cast), f32 accumulate.
    h = h.astype(w2_ref.dtype)
    out = jnp.dot(w2_ref[...], h, preferred_element_type=jnp.float32) + b2_ref[...]
    o_ref[...] = out.astype(o_ref.dtype)


def fine_network_pallas(x, w1, b1, w2, b2, *, tile_n=8192, l2_dtype=jnp.bfloat16):
    """FineNetwork forward. x: [N, 3] f32 -> [N, 4] f32.

    tile_n: points per grid step (multiple of 128). 8192 fits all generations with
            the 32 MiB scoped-VMEM limit set below; sweep 8192-16384 on v6e/v7x.
    l2_dtype: dtype of the layer-2 MXU inputs (bf16 => single MXU pass; pass
              jnp.float32 to fall back to the fully-f32 multi-pass matmul).
    """
    n = x.shape[0]
    n_blk = pl.cdiv(n, 128)                 # number of 128-point lane blocks
    tile_blk = max(1, tile_n // 128)
    if n_blk >= 2:
        # Keep >= 2 grid steps so ("parallel",) can shard across both v7x TCs.
        tile_blk = min(tile_blk, n_blk // 2)
    tile_blk = max(1, min(tile_blk, n_blk))
    tile_n = tile_blk * 128
    grid_n = pl.cdiv(n_blk, tile_blk)
    n_pad = grid_n * tile_n

    # Single fused transpose+pad: [N, 3] -> [8, n_pad] (zero-filled).
    x8 = jnp.pad(x.astype(jnp.float32).T,
                 ((0, K_PAD - INPUT_DIM), (0, n_pad - n)))
    w1p = jnp.pad(w1.astype(jnp.float32).T,
                  ((0, 0), (0, K_PAD - INPUT_DIM)))            # [256, 8]
    b1c = b1.astype(jnp.float32).reshape(HIDDEN_DIM, 1)        # [256, 1]
    w2t = w2.astype(l2_dtype).T                                # [4, 256] (bf16)
    b2c = b2.astype(jnp.float32).reshape(OUT_DIM, 1)           # [4, 1]

    out_t = pl.pallas_call(
        fine_mlp_kernel,
        out_shape=jax.ShapeDtypeStruct((OUT_DIM, n_pad), jnp.float32),
        grid=(grid_n,),
        in_specs=[
            pl.BlockSpec((K_PAD, tile_n), lambda i: (0, i)),          # x tile
            pl.BlockSpec((HIDDEN_DIM, K_PAD), lambda i: (0, 0)),      # w1^T resident
            pl.BlockSpec((HIDDEN_DIM, 1), lambda i: (0, 0)),          # b1 resident
            pl.BlockSpec((OUT_DIM, HIDDEN_DIM), lambda i: (0, 0)),    # w2^T resident
            pl.BlockSpec((OUT_DIM, 1), lambda i: (0, 0)),             # b2 resident
        ],
        out_specs=pl.BlockSpec((OUT_DIM, tile_n), lambda i: (0, i)),
        compiler_params=pltpu.CompilerParams(
            dimension_semantics=("parallel",),     # row tiles independent (2 TCs on v7x)
            vmem_limit_bytes=32 * 1024 * 1024,     # raise v5e's 16 MiB default scoped VMEM
        ),
    )(x8, w1p, b1c, w2t, b2c)

    return out_t[:, :n].T                                       # [N, 4]


def init_params(key):
    """Deterministic init mimicking nn.Linear's Kaiming-uniform-ish shapes."""
    k1, k2, k3, k4 = jax.random.split(key, 4)
    bound1 = 1.0 / jnp.sqrt(INPUT_DIM)
    bound2 = 1.0 / jnp.sqrt(HIDDEN_DIM)
    w1 = jax.random.uniform(k1, (INPUT_DIM, HIDDEN_DIM), jnp.float32, -bound1, bound1)
    b1 = jax.random.uniform(k2, (HIDDEN_DIM,), jnp.float32, -bound1, bound1)
    w2 = jax.random.uniform(k3, (HIDDEN_DIM, OUT_DIM), jnp.float32, -bound2, bound2)
    b2 = jax.random.uniform(k4, (OUT_DIM,), jnp.float32, -bound2, bound2)
    return w1, b1, w2, b2


def fine_network_ref(x, w1, b1, w2, b2):
    h = jnp.maximum(x @ w1 + b1, 0.0)
    return h @ w2 + b2


if __name__ == "__main__":
    key = jax.random.PRNGKey(0)
    kx, kp = jax.random.split(key)
    w1, b1, w2, b2 = init_params(kp)

    fwd = jax.jit(fine_network_pallas)

    # N=200: exercises padding + the ">=2 grid steps" clamp (grid=2, tile=128).
    # N=20000: exercises the large-tile path (tile=8192, multi-step grid).
    for N in (200, 20000):
        x = jax.random.normal(jax.random.fold_in(kx, N), (N, INPUT_DIM),
                              dtype=jnp.float32)
        out = jax.block_until_ready(fwd(x, w1, b1, w2, b2))
        ref = fine_network_ref(x, w1, b1, w2, b2)
        assert out.shape == (N, OUT_DIM)
        # Tolerance accounts for the single-pass bf16-input layer-2 MXU matmul
        # (f32 accumulation over K=256); gross bugs produce O(1e-1) errors.
        assert jnp.allclose(out, ref, atol=1e-2, rtol=1e-2), f"mismatch vs ref at N={N}"

    print("KERNEL_OK")
</pallas_src>

<mosaic_0001>
module attributes {stable_mosaic.version = 11 : i64} {
  func.func @fine_mlp_kernel(%arg0: i32, %arg1: memref<8x128xf32, #tpu.memory_space<vmem>>, %arg2: memref<256x8xf32, #tpu.memory_space<vmem>>, %arg3: memref<256x1xf32, #tpu.memory_space<vmem>>, %arg4: memref<4x256xbf16, #tpu.memory_space<vmem>>, %arg5: memref<4x1xf32, #tpu.memory_space<vmem>>, %arg6: memref<4x128xf32, #tpu.memory_space<vmem>>) attributes {dimension_semantics = [#tpu.dimension_semantics<parallel>], iteration_bounds = array<i64: 2>, scalar_prefetch = 0 : i64, scratch_operands = 0 : i64, tpu.core_type = #tpu.core_type<tc>, window_params = [{transform_indices = @transform_0, window_bounds = array<i64: 8, 128>}, {pipeline_mode = #tpu.pipeline_mode<synchronous>, transform_indices = @transform_1, window_bounds = array<i64: 256, 8>}, {pipeline_mode = #tpu.pipeline_mode<synchronous>, transform_indices = @transform_2, window_bounds = array<i64: 256, 1>}, {pipeline_mode = #tpu.pipeline_mode<synchronous>, transform_indices = @transform_3, window_bounds = array<i64: 4, 256>}, {pipeline_mode = #tpu.pipeline_mode<synchronous>, transform_indices = @transform_4, window_bounds = array<i64: 4, 1>}, {transform_indices = @transform_5, window_bounds = array<i64: 4, 128>}]} {
    %c0 = arith.constant 0 : index
    %c0_0 = arith.constant 0 : index
    %0 = vector.load %arg2[%c0, %c0_0] : memref<256x8xf32, #tpu.memory_space<vmem>>, vector<256x8xf32>
    %c0_1 = arith.constant 0 : index
    %c0_2 = arith.constant 0 : index
    %1 = vector.load %arg1[%c0_1, %c0_2] : memref<8x128xf32, #tpu.memory_space<vmem>>, vector<8x128xf32>
    %cst = arith.constant dense<0.000000e+00> : vector<256x128xf32>
    %2 = tpu.matmul %0, %1, %cst {dimension_numbers = #tpu.dot_dimension_numbers<[1], [0], [0], [1], [0, 0, 1, 1], [], []>} : vector<256x8xf32>, vector<8x128xf32>, vector<256x128xf32> -> vector<256x128xf32>
    %c0_3 = arith.constant 0 : index
    %c0_4 = arith.constant 0 : index
    %3 = vector.load %arg3[%c0_3, %c0_4] : memref<256x1xf32, #tpu.memory_space<vmem>>, vector<256x1xf32>
    %4 = vector.broadcast %3 : vector<256x1xf32> to vector<256x128xf32>
    %5 = arith.addf %2, %4 : vector<256x128xf32>
    %cst_5 = arith.constant 0.000000e+00 : f32
    %6 = vector.broadcast %cst_5 : f32 to vector<256x128xf32>
    %7 = arith.maximumf %5, %6 : vector<256x128xf32>
    %8 = arith.truncf %7 : vector<256x128xf32> to vector<256x128xbf16>
    %c0_6 = arith.constant 0 : index
    %c0_7 = arith.constant 0 : index
    %9 = vector.load %arg4[%c0_6, %c0_7] : memref<4x256xbf16, #tpu.memory_space<vmem>>, vector<4x256xbf16>
    %cst_8 = arith.constant dense<0.000000e+00> : vector<4x128xf32>
    %10 = tpu.matmul %9, %8, %cst_8 {dimension_numbers = #tpu.dot_dimension_numbers<[1], [0], [0], [1], [0, 0, 1, 1], [], []>} : vector<4x256xbf16>, vector<256x128xbf16>, vector<4x128xf32> -> vector<4x128xf32>
    %c0_9 = arith.constant 0 : index
    %c0_10 = arith.constant 0 : index
    %11 = vector.load %arg5[%c0_9, %c0_10] : memref<4x1xf32, #tpu.memory_space<vmem>>, vector<4x1xf32>
    %12 = vector.broadcast %11 : vector<4x1xf32> to vector<4x128xf32>
    %13 = arith.addf %10, %12 : vector<4x128xf32>
    %c0_11 = arith.constant 0 : index
    %c0_12 = arith.constant 0 : index
    %14 = vector.load %arg6[%c0_11, %c0_12] : memref<4x128xf32, #tpu.memory_space<vmem>>, vector<4x128xf32>
    tpu.vector_store %arg6[%c0_11, %c0_12], %13 {strides = array<i32>} : memref<4x128xf32, #tpu.memory_space<vmem>>, vector<4x128xf32>,
    return
  }
  func.func @transform_0(%arg0: i32) -> (i32, i32) {
    %c0_i32 = arith.constant 0 : i32
    %c0_i32_0 = arith.constant 0 : i32
    return %c0_i32, %arg0 : i32, i32
  }
  func.func @transform_1(%arg0: i32) -> (i32, i32) {
    %c0_i32 = arith.constant 0 : i32
    %c0_i32_0 = arith.constant 0 : i32
    %c0_i32_1 = arith.constant 0 : i32
    return %c0_i32, %c0_i32_0 : i32, i32
  }
  func.func @transform_2(%arg0: i32) -> (i32, i32) {
    %c0_i32 = arith.constant 0 : i32
    %c0_i32_0 = arith.constant 0 : i32
    %c0_i32_1 = arith.constant 0 : i32
    return %c0_i32, %c0_i32_0 : i32, i32
  }
  func.func @transform_3(%arg0: i32) -> (i32, i32) {
    %c0_i32 = arith.constant 0 : i32
    %c0_i32_0 = arith.constant 0 : i32
    %c0_i32_1 = arith.constant 0 : i32
    return %c0_i32, %c0_i32_0 : i32, i32
  }
  func.func @transform_4(%arg0: i32) -> (i32, i32) {
    %c0_i32 = arith.constant 0 : i32
    %c0_i32_0 = arith.constant 0 : i32
    %c0_i32_1 = arith.constant 0 : i32
    return %c0_i32, %c0_i32_0 : i32, i32
  }
  func.func @transform_5(%arg0: i32) -> (i32, i32) {
    %c0_i32 = arith.constant 0 : i32
    %c0_i32_0 = arith.constant 0 : i32
    return %c0_i32, %arg0 : i32, i32
  }
}

</mosaic_0001>

<llo_original>
// kernel: fine_network_pallas.1
$region0: #{fine_network_pallas.1}
  #allocation0 [shape = 'u32[]', space=smem, size = 0x4, offset = 0x4, fixed_abs, tag = 'smem constant byte address 0x4 - core index']
  #allocation1 [shape = 'u32[72,128]{1,0:T(1,128)}', space=vmem, size = 0x9000, scoped, tag = 'internal scratch']
  %s0 = inlined_call_operand.vmem [shape: f32[8,256], index: 0, kind: input, shape index: {}]
  %s1 = inlined_call_operand.vmem [shape: f32[256,8], index: 1, kind: input, shape index: {}]
  %s2 = inlined_call_operand.vmem [shape: f32[256,1], index: 2, kind: input, shape index: {}]
  %s3 = inlined_call_operand.vmem [shape: bf16[4,256], index: 3, kind: input, shape index: {}]
  %s4 = inlined_call_operand.vmem [shape: f32[4,1], index: 4, kind: input, shape index: {}]
  %s5 = inlined_call_operand.vmem [shape: f32[4,256], index: 5, kind: output, shape index: {}]
  %s6 = sld [smem:[#allocation0]]
  $region53: #{fine_network_pallas.1} parent=0
    _
  %s8 = ssub.s32 1, %s6
  %s9 = scalar_select 0, %s8, %s6
  loop: start=0, step=1, limit=4
  $region2: #{fine_network_pallas.1} parent=0 // loop_pre_header
    _
  $region3: #{fine_network_pallas.1} parent=0 // loop_header
    %s11 = sphi 0, %s15
    %p12 = scmp.ge.s32.totalorder %s11, 4
    %s21 = sphi 0, %s23
    %s24 = sphi 0, %s21
    %s25 = sphi 0, %s24
    %s41 = sphi 0, %s25
    %s45 = sphi 0, %s45
    %s47 = sphi 0, %s45
    %s48 = sphi 0, %s47
    %s62 = sphi 0, %s48
    %s66 = sphi 0, %s66
    %s68 = sphi 0, %s66
    %s69 = sphi 0, %s68
    %s83 = sphi 0, %s69
    %s87 = sphi 0, %s87
    %s89 = sphi 0, %s87
    %s90 = sphi 0, %s89
    %s104 = sphi 0, %s90
    %s108 = sphi 0, %s108
    %s110 = sphi 0, %s108
    %s111 = sphi 0, %s110
    %s125 = sphi 0, %s111
    %s131 = sphi 0, %s133
    %s134 = sphi 0, %s131
    %s135 = sphi 0, %s134
    %s151 = sphi 0, %s135
  $region4: #{fine_network_pallas.1} parent=0 // loop_header_branch
    %14 = sbr.rel (%p12) target = $region8
  $region5: #{fine_network_pallas.1} parent=0 // loop_body
    %s16 = ssub.s32 %s11, 1
    %s17 = ssub.s32 %s11, 2
    %s18 = sadd.s32 %s11, 1
    %s19 = ssub.s32 %s11, %s18
    %p20 = scmp.eq.s32.totalorder %s19, 0
    %s22 = sadd.s32 %s21, 1
    %s23 = scalar_select %p20, %s21, %s22
    %p26 = pneg %p20
    %p27 = scmp.eq.s32.totalorder %s11, 1
    %p28 = por %p26, %p27
    %p29 = scmp.ne.s32.totalorder %s21, %s24
    %p30 = scmp.eq.s32.totalorder %s11, 0
    %p31 = por %p29, %p30
    %p32 = scmp.ne.s32.totalorder %s21, %s24
    %p33 = scmp.eq.s32.totalorder %s16, 1
    %p34 = por %p32, %p33
    %p35 = scmp.ne.s32.totalorder %s24, %s25
    %p36 = scmp.eq.s32.totalorder %s16, 0
    %p37 = por %p35, %p36
    %p38 = scmp.ne.s32.totalorder %s24, %s25
    %p39 = scmp.eq.s32.totalorder %s17, 1
    %p40 = por %p38, %p39
    %p42 = scmp.ne.s32.totalorder %s25, %s41
    %p43 = scmp.eq.s32.totalorder %s17, 0
    %p44 = por %p42, %p43
    %s46 = sadd.s32 %s45, 1
    %p49 = scmp.eq.s32.totalorder %s11, 1
    %p50 = scmp.ne.s32.totalorder %s45, %s47
    %p51 = scmp.eq.s32.totalorder %s11, 0
    %p52 = por %p50, %p51
    %p53 = scmp.ne.s32.totalorder %s45, %s47
    %p54 = scmp.eq.s32.totalorder %s16, 1
    %p55 = por %p53, %p54
    %p56 = scmp.ne.s32.totalorder %s47, %s48
    %p57 = scmp.eq.s32.totalorder %s16, 0
    %p58 = por %p56, %p57
    %p59 = scmp.ne.s32.totalorder %s47, %s48
    %p60 = scmp.eq.s32.totalorder %s17, 1
    %p61 = por %p59, %p60
    %p63 = scmp.ne.s32.totalorder %s48, %s62
    %p64 = scmp.eq.s32.totalorder %s17, 0
    %p65 = por %p63, %p64
    %s67 = sadd.s32 %s66, 1
    %p70 = scmp.eq.s32.totalorder %s11, 1
    %p71 = scmp.ne.s32.totalorder %s66, %s68
    %p72 = scmp.eq.s32.totalorder %s11, 0
    %p73 = por %p71, %p72
    %p74 = scmp.ne.s32.totalorder %s66, %s68
    %p75 = scmp.eq.s32.totalorder %s16, 1
    %p76 = por %p74, %p75
    %p77 = scmp.ne.s32.totalorder %s68, %s69
    %p78 = scmp.eq.s32.totalorder %s16, 0
    %p79 = por %p77, %p78
    %p80 = scmp.ne.s32.totalorder %s68, %s69
    %p81 = scmp.eq.s32.totalorder %s17, 1
    %p82 = por %p80, %p81
    %p84 = scmp.ne.s32.totalorder %s69, %s83
    %p85 = scmp.eq.s32.totalorder %s17, 0
    %p86 = por %p84, %p85
    %s88 = sadd.s32 %s87, 1
    %p91 = scmp.eq.s32.totalorder %s11, 1
    %p92 = scmp.ne.s32.totalorder %s87, %s89
    %p93 = scmp.eq.s32.totalorder %s11, 0
    %p94 = por %p92, %p93
    %p95 = scmp.ne.s32.totalorder %s87, %s89
    %p96 = scmp.eq.s32.totalorder %s16, 1
    %p97 = por %p95, %p96
    %p98 = scmp.ne.s32.totalorder %s89, %s90
    %p99 = scmp.eq.s32.totalorder %s16, 0
    %p100 = por %p98, %p99
    %p101 = scmp.ne.s32.totalorder %s89, %s90
    %p102 = scmp.eq.s32.totalorder %s17, 1
    %p103 = por %p101, %p102
    %p105 = scmp.ne.s32.totalorder %s90, %s104
    %p106 = scmp.eq.s32.totalorder %s17, 0
    %p107 = por %p105, %p106
    %s109 = sadd.s32 %s108, 1
    %p112 = scmp.eq.s32.totalorder %s11, 1
    %p113 = scmp.ne.s32.totalorder %s108, %s110
    %p114 = scmp.eq.s32.totalorder %s11, 0
    %p115 = por %p113, %p114
    %p116 = scmp.ne.s32.totalorder %s108, %s110
    %p117 = scmp.eq.s32.totalorder %s16, 1
    %p118 = por %p116, %p117
    %p119 = scmp.ne.s32.totalorder %s110, %s111
    %p120 = scmp.eq.s32.totalorder %s16, 0
    %p121 = por %p119, %p120
    %p122 = scmp.ne.s32.totalorder %s110, %s111
    %p123 = scmp.eq.s32.totalorder %s17, 1
    %p124 = por %p122, %p123
    %p126 = scmp.ne.s32.totalorder %s111, %s125
    %p127 = scmp.eq.s32.totalorder %s17, 0
    %p128 = por %p126, %p127
    %s129 = ssub.s32 %s11, %s18
    %p130 = scmp.eq.s32.totalorder %s129, 0
    %s132 = sadd.s32 %s131, 1
    %s133 = scalar_select %p130, %s131, %s132
    %p136 = pneg %p130
    %p137 = scmp.eq.s32.totalorder %s11, 1
    %p138 = por %p136, %p137
    %p139 = scmp.ne.s32.totalorder %s131, %s134
    %p140 = scmp.eq.s32.totalorder %s11, 0
    %p141 = por %p139, %p140
    %p142 = scmp.ne.s32.totalorder %s131, %s134
    %p143 = scmp.eq.s32.totalorder %s16, 1
    %p144 = por %p142, %p143
    %p145 = scmp.ne.s32.totalorder %s134, %s135
    %p146 = scmp.eq.s32.totalorder %s16, 0
    %p147 = por %p145, %p146
    %p148 = scmp.ne.s32.totalorder %s134, %s135
    %p149 = scmp.eq.s32.totalorder %s17, 1
    %p150 = por %p148, %p149
    %p152 = scmp.ne.s32.totalorder %s135, %s151
    %p153 = scmp.eq.s32.totalorder %s17, 0
    %p154 = por %p152, %p153
    %p155 = scmp.le.s32.totalorder 1, %s11
    %p156 = scmp.lt.s32.totalorder %s11, 3
    %p157 = pnand %p155, %p156
    %p158 = pneg %p157
    // Predicated region
    $region9: #{fine_network_pallas.1} parent=5 // pred_check
      _
    $region10: #{fine_network_pallas.1} parent=5 // pred_check_branch
      %160 = sbr.rel (%p157) target = $region12
    $region11: #{fine_network_pallas.1} parent=5 // pred_region
      %s161 = ssub.s32 %s11, 1
      // Predicated region
      $region13: #{fine_network_pallas.1} parent=11 // pred_check
        %p162 = pneg %p58
      $region14: #{fine_network_pallas.1} parent=11 // pred_check_branch
        %164 = sbr.rel (%p162) target = $region16
      $region15: #{fine_network_pallas.1} parent=11 // pred_region
        _
      $region16: #{fine_network_pallas.1} parent=11 // pred_fallthru
        _
      // Predicated region
      $region17: #{fine_network_pallas.1} parent=11 // pred_check
        %p165 = pneg %p79
      $region18: #{fine_network_pallas.1} parent=11 // pred_check_branch
        %167 = sbr.rel (%p165) target = $region20
      $region19: #{fine_network_pallas.1} parent=11 // pred_region
        _
      $region20: #{fine_network_pallas.1} parent=11 // pred_fallthru
        _
      // Predicated region
      $region21: #{fine_network_pallas.1} parent=11 // pred_check
        %p168 = pneg %p100
      $region22: #{fine_network_pallas.1} parent=11 // pred_check_branch
        %170 = sbr.rel (%p168) target = $region24
      $region23: #{fine_network_pallas.1} parent=11 // pred_region
        _
      $region24: #{fine_network_pallas.1} parent=11 // pred_fallthru
        _
      // Predicated region
      $region25: #{fine_network_pallas.1} parent=11 // pred_check
        %p171 = pneg %p121
      $region26: #{fine_network_pallas.1} parent=11 // pred_check_branch
        %173 = sbr.rel (%p171) target = $region28
      $region27: #{fine_network_pallas.1} parent=11 // pred_region
        _
      $region28: #{fine_network_pallas.1} parent=11 // pred_fallthru
        _
    $region12: #{fine_network_pallas.1} parent=5 // pred_fallthru
      _
    %p174 = scmp.lt.s32.totalorder %s11, 2
    // Predicated region
    $region29: #{fine_network_pallas.1} parent=5 // pred_check
      %p175 = pneg %p174
    $region30: #{fine_network_pallas.1} parent=5 // pred_check_branch
      %177 = sbr.rel (%p175) target = $region32
    $region31: #{fine_network_pallas.1} parent=5 // pred_region
      // Predicated region
      $region33: #{fine_network_pallas.1} parent=31 // pred_check
        %p178 = pneg %p31
      $region34: #{fine_network_pallas.1} parent=31 // pred_check_branch
        %180 = sbr.rel (%p178) target = $region36
      $region35: #{fine_network_pallas.1} parent=31 // pred_region
        %p181 = scmp.lt.s32.totalorder %s11, 1
        %s182 = scalar_select %p181, %s11, 1
        %s183 = smul.addr %s182, 8
        %s184 = scalar_lea.vmem %s0, %s183
      $region36: #{fine_network_pallas.1} parent=31 // pred_fallthru
        _
    $region32: #{fine_network_pallas.1} parent=5 // pred_fallthru
      _
    %p185 = scmp.le.s32.totalorder 1, %s11
    %p186 = scmp.lt.s32.totalorder %s11, 3
    %p187 = pnand %p185, %p186
    %p188 = pneg %p187
    // Predicated region
    $region37: #{fine_network_pallas.1} parent=5 // pred_check
      _
    $region38: #{fine_network_pallas.1} parent=5 // pred_check_branch
      %190 = sbr.rel (%p187) target = $region40
    $region39: #{fine_network_pallas.1} parent=5 // pred_region
      %s191 = ssub.s32 %s11, 1
      %p192 = scmp.lt.s32.totalorder %s16, 1
      %s193 = scalar_select %p192, %s16, 1
      %s194 = smul.addr %s193, 8
      %s195 = scalar_lea.vmem %s0, %s194
      %p196 = pneg %p37
      %p197 = pneg %p34
      %p198 = pneg %p58
      %p199 = pneg %p55
      %p200 = pneg %p79
      %p201 = pneg %p76
      %p202 = pneg %p100
      %p203 = pneg %p97
      %p204 = pneg %p121
      %p205 = pneg %p118
      %p206 = pneg %p147
      %p207 = pneg %p144
      %p208 = scmp.lt.s32.totalorder %s16, 1
      %s209 = scalar_select %p208, %s16, 1
      %s210 = smul.addr %s209, 4
      %s211 = scalar_lea.vmem %s5, %s210
      %p212 = scmp.lt.s32.totalorder %s16, 1
      %s213 = scalar_select %p212, %s16, 1
      %s214 = smul.addr %s213, 8
      %s215 = scalar_lea.vmem %s0, %s214
      %p216 = scmp.lt.s32.totalorder %s16, 1
      %s217 = scalar_select %p216, %s16, 1
      %s218 = smul.addr %s217, 4
      %s219 = scalar_lea.vmem %s5, %s218
      %v220 = vld [vmem:[%s1] sm:$0xff]
      %v221 = vld [vmem:[%s1 + $0x8] sm:$0xff]
      %v222 = vld [vmem:[%s1 + $0x10] sm:$0xff]
      %v223 = vld [vmem:[%s1 + $0x18] sm:$0xff]
      %v224 = vld [vmem:[%s1 + $0x20] sm:$0xff]
      %v225 = vld [vmem:[%s1 + $0x28] sm:$0xff]
      %v226 = vld [vmem:[%s1 + $0x30] sm:$0xff]
      %v227 = vld [vmem:[%s1 + $0x38] sm:$0xff]
      %v228 = vld [vmem:[%s1 + $0x40] sm:$0xff]
      %v229 = vld [vmem:[%s1 + $0x48] sm:$0xff]
      %v230 = vld [vmem:[%s1 + $0x50] sm:$0xff]
      %v231 = vld [vmem:[%s1 + $0x58] sm:$0xff]
      %v232 = vld [vmem:[%s1 + $0x60] sm:$0xff]
      %v233 = vld [vmem:[%s1 + $0x68] sm:$0xff]
      %v234 = vld [vmem:[%s1 + $0x70] sm:$0xff]
      %v235 = vld [vmem:[%s1 + $0x78] sm:$0xff]
      %v236 = vld [vmem:[%s1 + $0x80] sm:$0xff]
      %v237 = vld [vmem:[%s1 + $0x88] sm:$0xff]
      %v238 = vld [vmem:[%s1 + $0x90] sm:$0xff]
      %v239 = vld [vmem:[%s1 + $0x98] sm:$0xff]
      %v240 = vld [vmem:[%s1 + $0xa0] sm:$0xff]
      %v241 = vld [vmem:[%s1 + $0xa8] sm:$0xff]
      %v242 = vld [vmem:[%s1 + $0xb0] sm:$0xff]
      %v243 = vld [vmem:[%s1 + $0xb8] sm:$0xff]
      %v244 = vld [vmem:[%s1 + $0xc0] sm:$0xff]
      %v245 = vld [vmem:[%s1 + $0xc8] sm:$0xff]
      %v246 = vld [vmem:[%s1 + $0xd0] sm:$0xff]
      %v247 = vld [vmem:[%s1 + $0xd8] sm:$0xff]
      %v248 = vld [vmem:[%s1 + $0xe0] sm:$0xff]
      %v249 = vld [vmem:[%s1 + $0xe8] sm:$0xff]
      %v250 = vld [vmem:[%s1 + $0xf0] sm:$0xff]
      %v251 = vld [vmem:[%s1 + $0xf8] sm:$0xff]
      %v252 = vld [vmem:[%s215] sm:$0xff]
      %v253 = vld [vmem:[%s2] sm:$0xff]
      %v254 = vld [vmem:[%s2 + $0x8] sm:$0xff]
      %v255 = vld [vmem:[%s2 + $0x10] sm:$0xff]
      %v256 = vld [vmem:[%s2 + $0x18] sm:$0xff]
      %v257 = vld [vmem:[%s2 + $0x20] sm:$0xff]
      %v258 = vld [vmem:[%s2 + $0x28] sm:$0xff]
      %v259 = vld [vmem:[%s2 + $0x30] sm:$0xff]
      %v260 = vld [vmem:[%s2 + $0x38] sm:$0xff]
      %v261 = vld [vmem:[%s2 + $0x40] sm:$0xff]
      %v262 = vld [vmem:[%s2 + $0x48] sm:$0xff]
      %v263 = vld [vmem:[%s2 + $0x50] sm:$0xff]
      %v264 = vld [vmem:[%s2 + $0x58] sm:$0xff]
      %v265 = vld [vmem:[%s2 + $0x60] sm:$0xff]
      %v266 = vld [vmem:[%s2 + $0x68] sm:$0xff]
      %v267 = vld [vmem:[%s2 + $0x70] sm:$0xff]
      %v268 = vld [vmem:[%s2 + $0x78] sm:$0xff]
      %v269 = vld [vmem:[%s2 + $0x80] sm:$0xff]
      %v270 = vld [vmem:[%s2 + $0x88] sm:$0xff]
      %v271 = vld [vmem:[%s2 + $0x90] sm:$0xff]
      %v272 = vld [vmem:[%s2 + $0x98] sm:$0xff]
      %v273 = vld [vmem:[%s2 + $0xa0] sm:$0xff]
      %v274 = vld [vmem:[%s2 + $0xa8] sm:$0xff]
      %v275 = vld [vmem:[%s2 + $0xb0] sm:$0xff]
      %v276 = vld [vmem:[%s2 + $0xb8] sm:$0xff]
      %v277 = vld [vmem:[%s2 + $0xc0] sm:$0xff]
      %v278 = vld [vmem:[%s2 + $0xc8] sm:$0xff]
      %v279 = vld [vmem:[%s2 + $0xd0] sm:$0xff]
      %v280 = vld [vmem:[%s2 + $0xd8] sm:$0xff]
      %v281 = vld [vmem:[%s2 + $0xe0] sm:$0xff]
      %v282 = vld [vmem:[%s2 + $0xe8] sm:$0xff]
      %v283 = vld [vmem:[%s2 + $0xf0] sm:$0xff]
      %v284 = vld [vmem:[%s2 + $0xf8] sm:$0xff]
      %286 = vset.pattern.permute.xlu0 0
      %287 = vperm.xlu0 %286, %v253
      %v288 = vpop.permute.xlu0 %287
      %291 = vset.pattern.permute.xlu0 0
      %292 = vperm.xlu0 %291, %v254
      %v293 = vpop.permute.xlu0 %292
      %296 = vset.pattern.permute.xlu0 0
      %297 = vperm.xlu0 %296, %v255
      %v298 = vpop.permute.xlu0 %297
      %301 = vset.pattern.permute.xlu0 0
      %302 = vperm.xlu0 %301, %v256
      %v303 = vpop.permute.xlu0 %302
      %306 = vset.pattern.permute.xlu0 0
      %307 = vperm.xlu0 %306, %v257
      %v308 = vpop.permute.xlu0 %307
      %311 = vset.pattern.permute.xlu0 0
      %312 = vperm.xlu0 %311, %v258
      %v313 = vpop.permute.xlu0 %312
      %316 = vset.pattern.permute.xlu0 0
      %317 = vperm.xlu0 %316, %v259
      %v318 = vpop.permute.xlu0 %317
      %321 = vset.pattern.permute.xlu0 0
      %322 = vperm.xlu0 %321, %v260
      %v323 = vpop.permute.xlu0 %322
      %326 = vset.pattern.permute.xlu0 0
      %327 = vperm.xlu0 %326, %v261
      %v328 = vpop.permute.xlu0 %327
      %331 = vset.pattern.permute.xlu0 0
      %332 = vperm.xlu0 %331, %v262
      %v333 = vpop.permute.xlu0 %332
      %336 = vset.pattern.permute.xlu0 0
      %337 = vperm.xlu0 %336, %v263
      %v338 = vpop.permute.xlu0 %337
      %341 = vset.pattern.permute.xlu0 0
      %342 = vperm.xlu0 %341, %v264
      %v343 = vpop.permute.xlu0 %342
      %346 = vset.pattern.permute.xlu0 0
      %347 = vperm.xlu0 %346, %v265
      %v348 = vpop.permute.xlu0 %347
      %351 = vset.pattern.permute.xlu0 0
      %352 = vperm.xlu0 %351, %v266
      %v353 = vpop.permute.xlu0 %352
      %356 = vset.pattern.permute.xlu0 0
      %357 = vperm.xlu0 %356, %v267
      %v358 = vpop.permute.xlu0 %357
      %361 = vset.pattern.permute.xlu0 0
      %362 = vperm.xlu0 %361, %v268
      %v363 = vpop.permute.xlu0 %362
      %366 = vset.pattern.permute.xlu0 0
      %367 = vperm.xlu0 %366, %v269
      %v368 = vpop.permute.xlu0 %367
      %371 = vset.pattern.permute.xlu0 0
      %372 = vperm.xlu0 %371, %v270
      %v373 = vpop.permute.xlu0 %372
      %376 = vset.pattern.permute.xlu0 0
      %377 = vperm.xlu0 %376, %v271
      %v378 = vpop.permute.xlu0 %377
      %381 = vset.pattern.permute.xlu0 0
      %382 = vperm.xlu0 %381, %v272
      %v383 = vpop.permute.xlu0 %382
      %386 = vset.pattern.permute.xlu0 0
      %387 = vperm.xlu0 %386, %v273
      %v388 = vpop.permute.xlu0 %387
      %391 = vset.pattern.permute.xlu0 0
      %392 = vperm.xlu0 %391, %v274
      %v393 = vpop.permute.xlu0 %392
      %396 = vset.pattern.permute.xlu0 0
      %397 = vperm.xlu0 %396, %v275
      %v398 = vpop.permute.xlu0 %397
      %401 = vset.pattern.permute.xlu0 0
      %402 = vperm.xlu0 %401, %v276
      %v403 = vpop.permute.xlu0 %402
      %406 = vset.pattern.permute.xlu0 0
      %407 = vperm.xlu0 %406, %v277
      %v408 = vpop.permute.xlu0 %407
      %411 = vset.pattern.permute.xlu0 0
      %412 = vperm.xlu0 %411, %v278
      %v413 = vpop.permute.xlu0 %412
      %416 = vset.pattern.permute.xlu0 0
      %417 = vperm.xlu0 %416, %v279
      %v418 = vpop.permute.xlu0 %417
      %421 = vset.pattern.permute.xlu0 0
      %422 = vperm.xlu0 %421, %v280
      %v423 = vpop.permute.xlu0 %422
      %426 = vset.pattern.permute.xlu0 0
      %427 = vperm.xlu0 %426, %v281
      %v428 = vpop.permute.xlu0 %427
      %431 = vset.pattern.permute.xlu0 0
      %432 = vperm.xlu0 %431, %v282
      %v433 = vpop.permute.xlu0 %432
      %436 = vset.pattern.permute.xlu0 0
      %437 = vperm.xlu0 %436, %v283
      %v438 = vpop.permute.xlu0 %437
      %441 = vset.pattern.permute.xlu0 0
      %442 = vperm.xlu0 %441, %v284
      %v443 = vpop.permute.xlu0 %442
      %vm445 = vcmask 64512
      %v447 = vsel %vm445, %v220, 0
      %v450 = vsel %vm445, %v221, 0
      %v453 = vsel %vm445, %v222, 0
      %v456 = vsel %vm445, %v223, 0
      %v459 = vsel %vm445, %v224, 0
      %v462 = vsel %vm445, %v225, 0
      %v465 = vsel %vm445, %v226, 0
      %v468 = vsel %vm445, %v227, 0
      %v471 = vsel %vm445, %v228, 0
      %v474 = vsel %vm445, %v229, 0
      %v477 = vsel %vm445, %v230, 0
      %v480 = vsel %vm445, %v231, 0
      %v483 = vsel %vm445, %v232, 0
      %v486 = vsel %vm445, %v233, 0
      %v489 = vsel %vm445, %v234, 0
      %v492 = vsel %vm445, %v235, 0
      %v495 = vsel %vm445, %v236, 0
      %v498 = vsel %vm445, %v237, 0
      %v501 = vsel %vm445, %v238, 0
      %v504 = vsel %vm445, %v239, 0
      %v507 = vsel %vm445, %v240, 0
      %v510 = vsel %vm445, %v241, 0
      %v513 = vsel %vm445, %v242, 0
      %v516 = vsel %vm445, %v243, 0
      %v519 = vsel %vm445, %v244, 0
      %v522 = vsel %vm445, %v245, 0
      %v525 = vsel %vm445, %v246, 0
      %v528 = vsel %vm445, %v247, 0
      %v531 = vsel %vm445, %v248, 0
      %v534 = vsel %vm445, %v249, 0
      %v537 = vsel %vm445, %v250, 0
      %v540 = vsel %vm445, %v251, 0
      %542 = vmatpush.msra.mxu0 0.0
      %543 = vmatpush.msra.mxu0 0.0
      %544 = vmatpush.msra.mxu0 0.0
      %545 = vmatpush.msra.mxu0 0.0
      %546 = vmatpush.msra.mxu0 0.0
      %547 = vmatpush.msra.mxu0 0.0
      %548 = vmatpush.msra.mxu0 0.0
      %549 = vmatpush.msra.mxu0 0.0
      %550 = vmatpush.msra.mxu0 0.0
      %551 = vmatpush.msra.mxu0 0.0
      %552 = vmatpush.msra.mxu0 0.0
      %553 = vmatpush.msra.mxu0 0.0
      %554 = vmatpush.msra.mxu0 0.0
      %555 = vmatpush.msra.mxu0 0.0
      %556 = vmatpush.msra.mxu0 0.0
      %557 = vmatpush.msra.mxu0 %v252
      %558 = vmatmul.f32.gmra.mxu0 %v447
      %v559 = vpop.f32.mrf.mxu0
      %v560 = vadd.f32 %v288, %v559
      %561 = vmatmul.f32.gmra.mxu0 %v450
      %v562 = vpop.f32.mrf.mxu0
      %v563 = vadd.f32 %v293, %v562
      %564 = vmatmul.f32.gmra.mxu0 %v453
      %v565 = vpop.f32.mrf.mxu0
      %v566 = vadd.f32 %v298, %v565
      %567 = vmatmul.f32.gmra.mxu0 %v456
      %v568 = vpop.f32.mrf.mxu0
      %v569 = vadd.f32 %v303, %v568
      %570 = vmatmul.f32.gmra.mxu0 %v459
      %v571 = vpop.f32.mrf.mxu0
      %v572 = vadd.f32 %v308, %v571
      %573 = vmatmul.f32.gmra.mxu0 %v462
      %v574 = vpop.f32.mrf.mxu0
      %v575 = vadd.f32 %v313, %v574
      %576 = vmatmul.f32.gmra.mxu0 %v465
      %v577 = vpop.f32.mrf.mxu0
      %v578 = vadd.f32 %v318, %v577
      %579 = vmatmul.f32.gmra.mxu0 %v468
      %v580 = vpop.f32.mrf.mxu0
      %v581 = vadd.f32 %v323, %v580
      %582 = vmatmul.f32.gmra.mxu0 %v471
      %v583 = vpop.f32.mrf.mxu0
      %v584 = vadd.f32 %v328, %v583
      %585 = vmatmul.f32.gmra.mxu0 %v474
      %v586 = vpop.f32.mrf.mxu0
      %v587 = vadd.f32 %v333, %v586
      %588 = vmatmul.f32.gmra.mxu0 %v477
      %v589 = vpop.f32.mrf.mxu0
      %v590 = vadd.f32 %v338, %v589
      %591 = vmatmul.f32.gmra.mxu0 %v480
      %v592 = vpop.f32.mrf.mxu0
      %v593 = vadd.f32 %v343, %v592
      %594 = vmatmul.f32.gmra.mxu0 %v483
      %v595 = vpop.f32.mrf.mxu0
      %v596 = vadd.f32 %v348, %v595
      %597 = vmatmul.f32.gmra.mxu0 %v486
      %v598 = vpop.f32.mrf.mxu0
      %v599 = vadd.f32 %v353, %v598
      %600 = vmatmul.f32.gmra.mxu0 %v489
      %v601 = vpop.f32.mrf.mxu0
      %v602 = vadd.f32 %v358, %v601
      %603 = vmatmul.f32.gmra.mxu0 %v492
      %v604 = vpop.f32.mrf.mxu0
      %v605 = vadd.f32 %v363, %v604
      %606 = vmatmul.f32.gmra.mxu0 %v495
      %v607 = vpop.f32.mrf.mxu0
      %v608 = vadd.f32 %v368, %v607
      %609 = vmatmul.f32.gmra.mxu0 %v498
      %v610 = vpop.f32.mrf.mxu0
      %v611 = vadd.f32 %v373, %v610
      %612 = vmatmul.f32.gmra.mxu0 %v501
      %v613 = vpop.f32.mrf.mxu0
      %v614 = vadd.f32 %v378, %v613
      %615 = vmatmul.f32.gmra.mxu0 %v504
      %v616 = vpop.f32.mrf.mxu0
      %v617 = vadd.f32 %v383, %v616
      %618 = vmatmul.f32.gmra.mxu0 %v507
      %v619 = vpop.f32.mrf.mxu0
      %v620 = vadd.f32 %v388, %v619
      %621 = vmatmul.f32.gmra.mxu0 %v510
      %v622 = vpop.f32.mrf.mxu0
      %v623 = vadd.f32 %v393, %v622
      %624 = vmatmul.f32.gmra.mxu0 %v513
      %v625 = vpop.f32.mrf.mxu0
      %v626 = vadd.f32 %v398, %v625
      %627 = vmatmul.f32.gmra.mxu0 %v516
      %v628 = vpop.f32.mrf.mxu0
      %v629 = vadd.f32 %v403, %v628
      %630 = vmatmul.f32.gmra.mxu0 %v519
      %v631 = vpop.f32.mrf.mxu0
      %v632 = vadd.f32 %v408, %v631
      %633 = vmatmul.f32.gmra.mxu0 %v522
      %v634 = vpop.f32.mrf.mxu0
      %v635 = vadd.f32 %v413, %v634
      %636 = vmatmul.f32.gmra.mxu0 %v525
      %v637 = vpop.f32.mrf.mxu0
      %v638 = vadd.f32 %v418, %v637
      %639 = vmatmul.f32.gmra.mxu0 %v528
      %v640 = vpop.f32.mrf.mxu0
      %v641 = vadd.f32 %v423, %v640
      %642 = vmatmul.f32.gmra.mxu0 %v531
      %v643 = vpop.f32.mrf.mxu0
      %v644 = vadd.f32 %v428, %v643
      %645 = vmatmul.f32.gmra.mxu0 %v534
      %v646 = vpop.f32.mrf.mxu0
      %v647 = vadd.f32 %v433, %v646
      %648 = vmatmul.f32.gmra.mxu0 %v537
      %v649 = vpop.f32.mrf.mxu0
      %v650 = vadd.f32 %v438, %v649
      %651 = vmatmul.f32.gmra.mxu0 %v540
      %v652 = vpop.f32.mrf.mxu0
      %v653 = vadd.f32 %v443, %v652
      %654 = vdwg.mxu0
      %v655 = vmax.f32 %v560, 0.0
      %v656 = vmax.f32 %v563, 0.0
      %v657 = vmax.f32 %v566, 0.0
      %v658 = vmax.f32 %v569, 0.0
      %v659 = vmax.f32 %v572, 0.0
      %v660 = vmax.f32 %v575, 0.0
      %v661 = vmax.f32 %v578, 0.0
      %v662 = vmax.f32 %v581, 0.0
      %v663 = vmax.f32 %v584, 0.0
      %v664 = vmax.f32 %v587, 0.0
      %v665 = vmax.f32 %v590, 0.0
      %v666 = vmax.f32 %v593, 0.0
      %v667 = vmax.f32 %v596, 0.0
      %v668 = vmax.f32 %v599, 0.0
      %v669 = vmax.f32 %v602, 0.0
      %v670 = vmax.f32 %v605, 0.0
      %v671 = vmax.f32 %v608, 0.0
      %v672 = vmax.f32 %v611, 0.0
      %v673 = vmax.f32 %v614, 0.0
      %v674 = vmax.f32 %v617, 0.0
      %v675 = vmax.f32 %v620, 0.0
      %v676 = vmax.f32 %v623, 0.0
      %v677 = vmax.f32 %v626, 0.0
      %v678 = vmax.f32 %v629, 0.0
      %v679 = vmax.f32 %v632, 0.0
      %v680 = vmax.f32 %v635, 0.0
      %v681 = vmax.f32 %v638, 0.0
      %v682 = vmax.f32 %v641, 0.0
      %v683 = vmax.f32 %v644, 0.0
      %v684 = vmax.f32 %v647, 0.0
      %v685 = vmax.f32 %v650, 0.0
      %v686 = vmax.f32 %v653, 0.0
      %v687 = vpack.c.bf16 %v656, %v655
      %v688 = vpack.c.bf16 %v658, %v657
      %v689 = vpack.c.bf16 %v660, %v659
      %v690 = vpack.c.bf16 %v662, %v661
      %v691 = vpack.c.bf16 %v664, %v663
      %v692 = vpack.c.bf16 %v666, %v665
      %v693 = vpack.c.bf16 %v668, %v667
      %v694 = vpack.c.bf16 %v670, %v669
      %v695 = vpack.c.bf16 %v672, %v671
      %v696 = vpack.c.bf16 %v674, %v673
      %v697 = vpack.c.bf16 %v676, %v675
      %v698 = vpack.c.bf16 %v678, %v677
      %v699 = vpack.c.bf16 %v680, %v679
      %v700 = vpack.c.bf16 %v682, %v681
      %v701 = vpack.c.bf16 %v684, %v683
      %v702 = vpack.c.bf16 %v686, %v685
      %v703 = vld [vmem:[%s3] sm:$0xf]
      %v704 = vld [vmem:[%s4] sm:$0xf]
      %706 = vset.pattern.permute.xlu0 0
      %707 = vperm.xlu0 %706, %v704
      %v708 = vpop.permute.xlu0 %707
      %711 = vst [vmem:[#allocation1] ss:$4 sm:$0xff] %v703
      %v712 = vld.sshfl [vmem:[#allocation1] sm:$0xff pattern:$0x73625140]
      %v713 = vld.sshfl [vmem:[#allocation1 + $0x8] sm:$0xff pattern:$0x73625140]
      %716 = vmatpush.bf16.msra.mxu0 %v694
      %717 = vmatpush.bf16.msra.mxu0 %v693
      %718 = vmatpush.bf16.msra.mxu0 %v692
      %719 = vmatpush.bf16.msra.mxu0 %v691
      %720 = vmatpush.bf16.msra.mxu0 %v690
      %721 = vmatpush.bf16.msra.mxu0 %v689
      %722 = vmatpush.bf16.msra.mxu0 %v688
      %723 = vmatpush.bf16.msra.mxu0 %v687
      %724 = vmatmul.bf16.gmra.mxu0 %v712
      %v725 = vpop.f32.mrf.mxu0
      %v726 = vadd.f32 %v708, %v725
      %v727 = vpop.f32.mrf.mxu0
      %728 = vdwg.mxu0
      %729 = vmatpush.bf16.msra.mxu0 %v702
      %730 = vmatpush.bf16.msra.mxu0 %v701
      %731 = vmatpush.bf16.msra.mxu0 %v700
      %732 = vmatpush.bf16.msra.mxu0 %v699
      %733 = vmatpush.bf16.msra.mxu0 %v698
      %734 = vmatpush.bf16.msra.mxu0 %v697
      %735 = vmatpush.bf16.msra.mxu0 %v696
      %736 = vmatpush.bf16.msra.mxu0 %v695
      %737 = vmatmul.bf16.gmra.mxu0 %v713
      %v738 = vpop.f32.mrf.mxu0
      %v739 = vadd.f32 %v726, %v738
      %v740 = vpop.f32.mrf.mxu0
      %741 = vdwg.mxu0
      %742 = vst [vmem:[%s219] sm:$0xf] %v739
      %p743 = scmp.lt.s32.totalorder %s16, 1
      %s744 = scalar_select %p743, %s16, 1
      %s745 = smul.addr %s744, 4
      %s746 = scalar_lea.vmem %s5, %s745
      // Predicated region
      $region41: #{fine_network_pallas.1} parent=39 // pred_check
        %p747 = pneg %p144
      $region42: #{fine_network_pallas.1} parent=39 // pred_check_branch
        %749 = sbr.rel (%p747) target = $region44
      $region43: #{fine_network_pallas.1} parent=39 // pred_region
        _
      $region44: #{fine_network_pallas.1} parent=39 // pred_fallthru
        _
    $region40: #{fine_network_pallas.1} parent=5 // pred_fallthru
      _
    %p750 = scmp.le.s32.totalorder 2, %s11
    // Predicated region
    $region45: #{fine_network_pallas.1} parent=5 // pred_check
      %p751 = pneg %p750
    $region46: #{fine_network_pallas.1} parent=5 // pred_check_branch
      %753 = sbr.rel (%p751) target = $region48
    $region47: #{fine_network_pallas.1} parent=5 // pred_region
      %s754 = ssub.s32 %s11, 2
      // Predicated region
      $region49: #{fine_network_pallas.1} parent=47 // pred_check
        %p755 = pneg %p150
      $region50: #{fine_network_pallas.1} parent=47 // pred_check_branch
        %757 = sbr.rel (%p755) target = $region52
      $region51: #{fine_network_pallas.1} parent=47 // pred_region
        %p758 = scmp.lt.s32.totalorder %s17, 1
        %s759 = scalar_select %p758, %s17, 1
        %s760 = smul.addr %s759, 4
        %s761 = scalar_lea.vmem %s5, %s760
      $region52: #{fine_network_pallas.1} parent=47 // pred_fallthru
        _
    $region48: #{fine_network_pallas.1} parent=5 // pred_fallthru
      _
  $region6: #{fine_network_pallas.1} parent=0 // loop_footer
    %s15 = sadd.s32 1, %s11
  $region7: #{fine_network_pallas.1} parent=0 // loop_footer_branch
    %10 = sbr.rel target = $region3
  $region8: #{fine_network_pallas.1} parent=0 // loop_exit
    _

</llo_original>
